<compile_context>
chip_gen: v5e
topology: v5e:2x2
jax: 0.10.0
libtpu: 0.0.40
codegen_flags: <defaults>
</compile_context>

<pallas_src>
import math

import jax
import jax.numpy as jnp
from jax.experimental import pallas as pl
from jax.experimental.pallas import tpu as pltpu


def make_pe(dims_add: int = 10, max_len: int = 30) -> jnp.ndarray:
    """Deterministic sinusoidal buffer, identical to the PyTorch __init__."""
    pe = jnp.zeros((max_len, dims_add), dtype=jnp.float32)
    position = jnp.arange(0, max_len, dtype=jnp.float32)[:, None]
    div_term_enum = jnp.arange(0, dims_add, 2, dtype=jnp.float32)
    div_term_denom = -math.log(10000.0) / dims_add + 1
    div_term = jnp.exp(div_term_enum * div_term_denom)
    pe = pe.at[:, 0::2].set(jnp.sin(position * div_term))
    pe = pe.at[:, 1::2].set(jnp.cos(position * div_term))
    pe = pe.at[0, :].set(0.0)
    return pe


def _seq_pos_embed_kernel(xt_ref, tri_ref, pe_ref, out_ref):
    # xt_ref : [S, TB]          int32   sequence-major input slice (TB on lanes)
    # tri_ref: [S, S]           f32     resident (reverse-)cumsum matrix
    # pe_ref : [S, D, max_len]  f32     resident pe^T, pre-broadcast over S
    # out_ref: [S, D, TB]       f32     d-major output block (TB on lanes -> dense vst)
    S, D, max_len = pe_ref.shape
    TB = xt_ref.shape[1]

    vals_t = (xt_ref[...] != 0).astype(jnp.float32)                    # [S, TB]

    # (Reverse-)cumsum along S as one small MXU matmul with N = TB on lanes:
    #   idx[s, b] = sum_t tri[s, t] * (x[b, t] != 0)
    # f32 accumulation of 0/1 products is exact, so the int cast is safe.
    idx_f = jnp.dot(tri_ref[...], vals_t, preferred_element_type=jnp.float32)
    idx = jnp.minimum(idx_f.astype(jnp.int32), max_len - 1)            # [S, TB]

    # One-hot with the batch tile on the lane axis: [S, max_len, TB].
    # (max_len=30 pads only to 32 sublanes; lanes stay fully dense.)
    m_iota = jax.lax.broadcasted_iota(jnp.int32, (S, max_len, TB), 1)
    onehot = (m_iota == idx[:, None, :]).astype(jnp.float32)           # [S, ML, TB]

    # Row-gather pe[idx] as a batched matmul (batch=s, M=D, K=max_len, N=TB):
    #   out[s, d, b] = sum_m pe[s, d, m] * onehot[s, m, b]
    # Both operands are in native MXU orientation (lhs contracts its minor dim,
    # rhs contracts its major dim), result lanes (N=TB) are fully dense.
    out_ref[...] = jax.lax.dot_general(
        pe_ref[...], onehot,
        dimension_numbers=(((2,), (1,)), ((0,), (0,))),
        preferred_element_type=jnp.float32)


def seq_positional_embed(x: jnp.ndarray, pe: jnp.ndarray,
                         inverted: bool = True, block_b: int = 512) -> jnp.ndarray:
    """x: [B, S] int32, zero-padded sequences.  Returns [S, B, D] float32."""
    B, S = x.shape
    max_len, D = pe.shape

    # Batch tile on the lane axis: full batch when B <= 128, otherwise a
    # multiple of 128 chosen so there are at least 2 grid tiles (v7x megacore
    # can shard the "parallel" axis), capped by block_b.  Uneven grids are
    # fine: OOB lanes compute garbage that is dropped on writeback.
    if B <= 128:
        tb = B
    else:
        tb = min(block_b, max(128, ((B // 2) // 128) * 128))
    grid = (pl.cdiv(B, tb),)

    # Tiny input transpose (B*S*4 bytes) so the kernel works sequence-major.
    xt = jnp.transpose(x.astype(jnp.int32), (1, 0))                    # [S, B]

    # Triangular scan matrix, computed once and kept resident across the grid.
    t = jnp.arange(S, dtype=jnp.int32)
    if inverted:
        tri = (t[None, :] >= t[:, None]).astype(jnp.float32)   # idx[s] = sum_{t >= s}
    else:
        tri = (t[None, :] <= t[:, None]).astype(jnp.float32)   # idx[s] = sum_{t <= s}

    # pe^T pre-broadcast over S (36 KB resident) so the gather matmul is a
    # plain batched dot_general with both operands in native orientation.
    pe_sdm = jnp.broadcast_to(jnp.transpose(pe, (1, 0))[None, :, :], (S, D, max_len))

    cost = pl.CostEstimate(
        flops=2 * B * S * S + 2 * B * S * max_len * D,
        transcendentals=0,
        bytes_accessed=int(B * S * 4 + S * S * 4 + S * D * max_len * 4 + S * D * B * 4),
    )

    out_sdb = pl.pallas_call(
        _seq_pos_embed_kernel,
        out_shape=jax.ShapeDtypeStruct((S, D, B), jnp.float32),
        grid=grid,
        in_specs=[
            pl.BlockSpec((S, tb), lambda i: (0, i)),             # x^T, tiled over B
            pl.BlockSpec((S, S), lambda i: (0, 0)),              # tri, resident
            pl.BlockSpec((S, D, max_len), lambda i: (0, 0, 0)),  # pe^T, resident
        ],
        out_specs=pl.BlockSpec((S, D, tb), lambda i: (0, 0, i)),  # dense lane stores
        compiler_params=pltpu.CompilerParams(
            dimension_semantics=("parallel",),
            vmem_limit_bytes=32 * 1024 * 1024,
        ),
        cost_estimate=cost,
    )(xt, tri, pe_sdm)

    # Final d-major -> b-major relayout as one XLA transpose over the small
    # output (S*B*D*4 bytes); keeps every in-kernel op lane-dense.
    return jnp.transpose(out_sdb, (0, 2, 1))                           # [S, B, D]


def _reference(x: jnp.ndarray, pe: jnp.ndarray, inverted: bool = True) -> jnp.ndarray:
    vals = (x != 0).astype(jnp.int32)
    if inverted:
        vals = jnp.flip(vals, axis=1)
    idx = jnp.cumsum(vals, axis=1)
    out = pe[idx]                         # [B, S, D]
    if inverted:
        out = jnp.flip(out, axis=1)
    return jnp.transpose(out, (1, 0, 2))  # [S, B, D]


if __name__ == "__main__":
    dims_add, max_len = 10, 30
    pe = make_pe(dims_add, max_len)
    key = jax.random.PRNGKey(0)

    # Case 1: tiny module-scale input (B=2, S=8), grid = (1,).
    B, S = 2, 8
    k1, k2, key = jax.random.split(key, 3)
    tokens = jax.random.randint(k1, (B, S), minval=1, maxval=7, dtype=jnp.int32)
    lens = jnp.array([[5], [6]], dtype=jnp.int32)
    x = tokens * (jnp.arange(S)[None, :] < lens).astype(jnp.int32)   # zero-padded seqs

    out = jax.block_until_ready(seq_positional_embed(x, pe, inverted=True))
    ref = _reference(x, pe, inverted=True)
    assert out.shape == (S, B, dims_add), out.shape
    assert jnp.allclose(out, ref, atol=1e-5, rtol=1e-5), "mismatch (inverted=True)"

    out_ni = jax.block_until_ready(seq_positional_embed(x, pe, inverted=False))
    ref_ni = _reference(x, pe, inverted=False)
    assert jnp.allclose(out_ni, ref_ni, atol=1e-5, rtol=1e-5), "mismatch (inverted=False)"

    # Case 2: exercises the parallel batch grid (2 tiles of 128 lanes).
    B2, S2 = 256, 16
    k3, k4 = jax.random.split(k2)
    tokens2 = jax.random.randint(k3, (B2, S2), minval=1, maxval=7, dtype=jnp.int32)
    lens2 = jax.random.randint(k4, (B2, 1), minval=0, maxval=S2 + 1, dtype=jnp.int32)
    x2 = tokens2 * (jnp.arange(S2)[None, :] < lens2).astype(jnp.int32)

    out2 = jax.block_until_ready(
        seq_positional_embed(x2, pe, inverted=True, block_b=128))
    ref2 = _reference(x2, pe, inverted=True)
    assert out2.shape == (S2, B2, dims_add), out2.shape
    assert jnp.allclose(out2, ref2, atol=1e-5, rtol=1e-5), "mismatch (gridded case)"

    print("KERNEL_OK")
</pallas_src>

<mosaic_0001>
module attributes {stable_mosaic.version = 11 : i64} {
  func.func @_seq_pos_embed_kernel(%arg0: i32, %arg1: memref<8x2xi32, #tpu.memory_space<vmem>>, %arg2: memref<8x8xf32, #tpu.memory_space<vmem>>, %arg3: memref<8x10x30xf32, #tpu.memory_space<vmem>>, %arg4: memref<8x10x2xf32, #tpu.memory_space<vmem>>) attributes {dimension_semantics = [#tpu.dimension_semantics<parallel>], iteration_bounds = array<i64: 1>, scalar_prefetch = 0 : i64, scratch_operands = 0 : i64, tpu.core_type = #tpu.core_type<tc>, window_params = [{transform_indices = @transform_0, window_bounds = array<i64: 8, 2>}, {pipeline_mode = #tpu.pipeline_mode<synchronous>, transform_indices = @transform_1, window_bounds = array<i64: 8, 8>}, {pipeline_mode = #tpu.pipeline_mode<synchronous>, transform_indices = @transform_2, window_bounds = array<i64: 8, 10, 30>}, {transform_indices = @transform_3, window_bounds = array<i64: 8, 10, 2>}]} {
    %c0 = arith.constant 0 : index
    %c0_0 = arith.constant 0 : index
    %0 = vector.load %arg1[%c0, %c0_0] : memref<8x2xi32, #tpu.memory_space<vmem>>, vector<8x2xi32>
    %c0_i32 = arith.constant 0 : i32
    %1 = vector.broadcast %c0_i32 : i32 to vector<8x2xi32>
    %2 = arith.cmpi ne, %0, %1 : vector<8x2xi32>
    %3 = arith.extui %2 : vector<8x2xi1> to vector<8x2xi32>
    %4 = arith.sitofp %3 : vector<8x2xi32> to vector<8x2xf32>
    %c0_1 = arith.constant 0 : index
    %c0_2 = arith.constant 0 : index
    %5 = vector.load %arg2[%c0_1, %c0_2] : memref<8x8xf32, #tpu.memory_space<vmem>>, vector<8x8xf32>
    %cst = arith.constant dense<0.000000e+00> : vector<8x2xf32>
    %6 = tpu.matmul %5, %4, %cst {dimension_numbers = #tpu.dot_dimension_numbers<[1], [0], [0], [1], [0, 0, 1, 1], [], []>} : vector<8x8xf32>, vector<8x2xf32>, vector<8x2xf32> -> vector<8x2xf32>
    %7 = arith.fptosi %6 : vector<8x2xf32> to vector<8x2xi32>
    %c29_i32 = arith.constant 29 : i32
    %8 = vector.broadcast %c29_i32 : i32 to vector<8x2xi32>
    %9 = arith.minsi %7, %8 : vector<8x2xi32>
    %10 = tpu.iota {dimensions = array<i32: 1>} : vector<8x30x2xi32>
    %11 = vector.shape_cast %9 : vector<8x2xi32> to vector<8x1x2xi32>
    %12 = vector.broadcast %11 : vector<8x1x2xi32> to vector<8x30x2xi32>
    %13 = arith.cmpi eq, %10, %12 : vector<8x30x2xi32>
    %14 = arith.extui %13 : vector<8x30x2xi1> to vector<8x30x2xi32>
    %15 = arith.sitofp %14 : vector<8x30x2xi32> to vector<8x30x2xf32>
    %c0_3 = arith.constant 0 : index
    %c0_4 = arith.constant 0 : index
    %c0_5 = arith.constant 0 : index
    %16 = vector.load %arg3[%c0_3, %c0_4, %c0_5] : memref<8x10x30xf32, #tpu.memory_space<vmem>>, vector<8x10x30xf32>
    %cst_6 = arith.constant dense<0.000000e+00> : vector<8x10x2xf32>
    %17 = tpu.matmul %16, %15, %cst_6 {dimension_numbers = #tpu.dot_dimension_numbers<[2], [1], [1], [2], [0, 0, 0, 1, 1, 2], [0], [0]>} : vector<8x10x30xf32>, vector<8x30x2xf32>, vector<8x10x2xf32> -> vector<8x10x2xf32>
    %c0_7 = arith.constant 0 : index
    %c0_8 = arith.constant 0 : index
    %c0_9 = arith.constant 0 : index
    %18 = vector.load %arg4[%c0_7, %c0_8, %c0_9] : memref<8x10x2xf32, #tpu.memory_space<vmem>>, vector<8x10x2xf32>
    tpu.vector_store %arg4[%c0_7, %c0_8, %c0_9], %17 {strides = array<i32>} : memref<8x10x2xf32, #tpu.memory_space<vmem>>, vector<8x10x2xf32>,
    return
  }
  func.func @transform_0(%arg0: i32) -> (i32, i32) {
    %c0_i32 = arith.constant 0 : i32
    %c0_i32_0 = arith.constant 0 : i32
    return %c0_i32, %arg0 : i32, i32
  }
  func.func @transform_1(%arg0: i32) -> (i32, i32) {
    %c0_i32 = arith.constant 0 : i32
    %c0_i32_0 = arith.constant 0 : i32
    %c0_i32_1 = arith.constant 0 : i32
    return %c0_i32, %c0_i32_0 : i32, i32
  }
  func.func @transform_2(%arg0: i32) -> (i32, i32, i32) {
    %c0_i32 = arith.constant 0 : i32
    %c0_i32_0 = arith.constant 0 : i32
    %c0_i32_1 = arith.constant 0 : i32
    %c0_i32_2 = arith.constant 0 : i32
    return %c0_i32, %c0_i32_0, %c0_i32_1 : i32, i32, i32
  }
  func.func @transform_3(%arg0: i32) -> (i32, i32, i32) {
    %c0_i32 = arith.constant 0 : i32
    %c0_i32_0 = arith.constant 0 : i32
    %c0_i32_1 = arith.constant 0 : i32
    return %c0_i32, %c0_i32_0, %arg0 : i32, i32, i32
  }
}

</mosaic_0001>

<llo_original>
// kernel: tpu_custom_call.1
$region0: #{tpu_custom_call.1}
  #allocation0 [shape = 'u32[]', space=smem, size = 0x4, offset = 0x4, fixed_abs, tag = 'smem constant byte address 0x4 - core index']
  #allocation1 [shape = 'u32[72,128]{1,0:T(1,128)}', space=vmem, size = 0x9000, scoped, tag = 'internal scratch']
  %s0 = inlined_call_operand.vmem [shape: s32[8,2], index: 0, kind: input, shape index: {}]
  %s1 = inlined_call_operand.vmem [shape: f32[8,8], index: 1, kind: input, shape index: {}]
  %s2 = inlined_call_operand.vmem [shape: f32[8,10,30], index: 2, kind: input, shape index: {}]
  %s3 = inlined_call_operand.vmem [shape: f32[8,10,2], index: 3, kind: output, shape index: {}]
  %s4 = sld [smem:[#allocation0]]
  $region22: #{tpu_custom_call.1} parent=0
    _
  %s6 = ssub.s32 1, %s4
  %s7 = scalar_select 0, %s6, %s4
  // Predicated region
  $region2: #{tpu_custom_call.1} parent=0 // pred_check
    _
  $region3: #{tpu_custom_call.1} parent=0 // pred_check_branch
    %9 = sbr.rel (0) target = $region5
  $region4: #{tpu_custom_call.1} parent=0 // pred_region
    _
  $region5: #{tpu_custom_call.1} parent=0 // pred_fallthru
    _
  // Predicated region
  $region6: #{tpu_custom_call.1} parent=0 // pred_check
    _
  $region7: #{tpu_custom_call.1} parent=0 // pred_check_branch
    %11 = sbr.rel (0) target = $region9
  $region8: #{tpu_custom_call.1} parent=0 // pred_region
    _
  $region9: #{tpu_custom_call.1} parent=0 // pred_fallthru
    _
  // Predicated region
  $region10: #{tpu_custom_call.1} parent=0 // pred_check
    _
  $region11: #{tpu_custom_call.1} parent=0 // pred_check_branch
    %13 = sbr.rel (0) target = $region13
  $region12: #{tpu_custom_call.1} parent=0 // pred_region
    _
  $region13: #{tpu_custom_call.1} parent=0 // pred_fallthru
    _
  %v14 = vld [vmem:[%s0] sm:$0xff]
  %vm15 = vcmp.ne.s32.totalorder %v14, 0
  %v16 = vsel %vm15, 1, 0
  %v17 = vcvt.s32.f32 %v16
  %v18 = vld [vmem:[%s1] sm:$0xff]
  %vm19 = vcmask 64512
  %v21 = vsel %vm19, %v18, 0
  %23 = vmatpush.msra.mxu0 0.0
  %24 = vmatpush.msra.mxu0 0.0
  %25 = vmatpush.msra.mxu0 0.0
  %26 = vmatpush.msra.mxu0 0.0
  %27 = vmatpush.msra.mxu0 0.0
  %28 = vmatpush.msra.mxu0 0.0
  %29 = vmatpush.msra.mxu0 0.0
  %30 = vmatpush.msra.mxu0 0.0
  %31 = vmatpush.msra.mxu0 0.0
  %32 = vmatpush.msra.mxu0 0.0
  %33 = vmatpush.msra.mxu0 0.0
  %34 = vmatpush.msra.mxu0 0.0
  %35 = vmatpush.msra.mxu0 0.0
  %36 = vmatpush.msra.mxu0 0.0
  %37 = vmatpush.msra.mxu0 0.0
  %38 = vmatpush.msra.mxu0 %v17
  %39 = vmatmul.f32.gmra.mxu0 %v21
  %v40 = vpop.f32.mrf.mxu0
  %v41 = vadd.f32 0.0, %v40
  %42 = vdwg.mxu0
  %v43 = vcvt.f32.s32.to.zero.pseudo %v41
  %vm44 = vcmp.lt.s32.totalorder %v43, 29
  %v45 = vsel %vm44, %v43, 29
  %v46 = vlaneseq
  %v47 = vshrl.u32 %v46, 7
  %v48 = vadd.s32 %v47, 8
  %v49 = vadd.s32 %v47, 16
  %v50 = vadd.s32 %v47, 24
  %v51 = vrot.slane %v45, 1
  %v52 = vrot.slane %v45, 2
  %v53 = vrot.slane %v45, 3
  %v54 = vrot.slane %v45, 4
  %v55 = vrot.slane %v45, 5
  %v56 = vrot.slane %v45, 6
  %v57 = vrot.slane %v45, 7
  %v58 = vperm.slane %v45, 0
  %v59 = vperm.slane %v51, 0
  %v60 = vperm.slane %v52, 0
  %v61 = vperm.slane %v53, 0
  %v62 = vperm.slane %v54, 0
  %v63 = vperm.slane %v55, 0
  %v64 = vperm.slane %v56, 0
  %v65 = vperm.slane %v57, 0
  %vm66 = vcmp.eq.s32.totalorder %v47, %v58
  %vm67 = vcmp.eq.s32.totalorder %v48, %v58
  %vm68 = vcmp.eq.s32.totalorder %v49, %v58
  %vm69 = vcmp.eq.s32.totalorder %v50, %v58
  %vm70 = vcmp.eq.s32.totalorder %v47, %v59
  %vm71 = vcmp.eq.s32.totalorder %v48, %v59
  %vm72 = vcmp.eq.s32.totalorder %v49, %v59
  %vm73 = vcmp.eq.s32.totalorder %v50, %v59
  %vm74 = vcmp.eq.s32.totalorder %v47, %v60
  %vm75 = vcmp.eq.s32.totalorder %v48, %v60
  %vm76 = vcmp.eq.s32.totalorder %v49, %v60
  %vm77 = vcmp.eq.s32.totalorder %v50, %v60
  %vm78 = vcmp.eq.s32.totalorder %v47, %v61
  %vm79 = vcmp.eq.s32.totalorder %v48, %v61
  %vm80 = vcmp.eq.s32.totalorder %v49, %v61
  %vm81 = vcmp.eq.s32.totalorder %v50, %v61
  %vm82 = vcmp.eq.s32.totalorder %v47, %v62
  %vm83 = vcmp.eq.s32.totalorder %v48, %v62
  %vm84 = vcmp.eq.s32.totalorder %v49, %v62
  %vm85 = vcmp.eq.s32.totalorder %v50, %v62
  %vm86 = vcmp.eq.s32.totalorder %v47, %v63
  %vm87 = vcmp.eq.s32.totalorder %v48, %v63
  %vm88 = vcmp.eq.s32.totalorder %v49, %v63
  %vm89 = vcmp.eq.s32.totalorder %v50, %v63
  %vm90 = vcmp.eq.s32.totalorder %v47, %v64
  %vm91 = vcmp.eq.s32.totalorder %v48, %v64
  %vm92 = vcmp.eq.s32.totalorder %v49, %v64
  %vm93 = vcmp.eq.s32.totalorder %v50, %v64
  %vm94 = vcmp.eq.s32.totalorder %v47, %v65
  %vm95 = vcmp.eq.s32.totalorder %v48, %v65
  %vm96 = vcmp.eq.s32.totalorder %v49, %v65
  %vm97 = vcmp.eq.s32.totalorder %v50, %v65
  %v98 = vsel %vm66, 1, 0
  %v99 = vsel %vm67, 1, 0
  %v100 = vsel %vm68, 1, 0
  %v101 = vsel %vm69, 1, 0
  %v102 = vsel %vm70, 1, 0
  %v103 = vsel %vm71, 1, 0
  %v104 = vsel %vm72, 1, 0
  %v105 = vsel %vm73, 1, 0
  %v106 = vsel %vm74, 1, 0
  %v107 = vsel %vm75, 1, 0
  %v108 = vsel %vm76, 1, 0
  %v109 = vsel %vm77, 1, 0
  %v110 = vsel %vm78, 1, 0
  %v111 = vsel %vm79, 1, 0
  %v112 = vsel %vm80, 1, 0
  %v113 = vsel %vm81, 1, 0
  %v114 = vsel %vm82, 1, 0
  %v115 = vsel %vm83, 1, 0
  %v116 = vsel %vm84, 1, 0
  %v117 = vsel %vm85, 1, 0
  %v118 = vsel %vm86, 1, 0
  %v119 = vsel %vm87, 1, 0
  %v120 = vsel %vm88, 1, 0
  %v121 = vsel %vm89, 1, 0
  %v122 = vsel %vm90, 1, 0
  %v123 = vsel %vm91, 1, 0
  %v124 = vsel %vm92, 1, 0
  %v125 = vsel %vm93, 1, 0
  %v126 = vsel %vm94, 1, 0
  %v127 = vsel %vm95, 1, 0
  %v128 = vsel %vm96, 1, 0
  %v129 = vsel %vm97, 1, 0
  %v130 = vcvt.s32.f32 %v98
  %v131 = vcvt.s32.f32 %v99
  %v132 = vcvt.s32.f32 %v100
  %v133 = vcvt.s32.f32 %v101
  %v134 = vcvt.s32.f32 %v102
  %v135 = vcvt.s32.f32 %v103
  %v136 = vcvt.s32.f32 %v104
  %v137 = vcvt.s32.f32 %v105
  %v138 = vcvt.s32.f32 %v106
  %v139 = vcvt.s32.f32 %v107
  %v140 = vcvt.s32.f32 %v108
  %v141 = vcvt.s32.f32 %v109
  %v142 = vcvt.s32.f32 %v110
  %v143 = vcvt.s32.f32 %v111
  %v144 = vcvt.s32.f32 %v112
  %v145 = vcvt.s32.f32 %v113
  %v146 = vcvt.s32.f32 %v114
  %v147 = vcvt.s32.f32 %v115
  %v148 = vcvt.s32.f32 %v116
  %v149 = vcvt.s32.f32 %v117
  %v150 = vcvt.s32.f32 %v118
  %v151 = vcvt.s32.f32 %v119
  %v152 = vcvt.s32.f32 %v120
  %v153 = vcvt.s32.f32 %v121
  %v154 = vcvt.s32.f32 %v122
  %v155 = vcvt.s32.f32 %v123
  %v156 = vcvt.s32.f32 %v124
  %v157 = vcvt.s32.f32 %v125
  %v158 = vcvt.s32.f32 %v126
  %v159 = vcvt.s32.f32 %v127
  %v160 = vcvt.s32.f32 %v128
  %v161 = vcvt.s32.f32 %v129
  %v162 = vld [vmem:[%s2] sm:$0xff]
  %v163 = vld [vmem:[%s2 + $0x8] sm:$0x3]
  %v164 = vld [vmem:[%s2 + $0x10] sm:$0xff]
  %v165 = vld [vmem:[%s2 + $0x18] sm:$0x3]
  %v166 = vld [vmem:[%s2 + $0x20] sm:$0xff]
  %v167 = vld [vmem:[%s2 + $0x28] sm:$0x3]
  %v168 = vld [vmem:[%s2 + $0x30] sm:$0xff]
  %v169 = vld [vmem:[%s2 + $0x38] sm:$0x3]
  %v170 = vld [vmem:[%s2 + $0x40] sm:$0xff]
  %v171 = vld [vmem:[%s2 + $0x48] sm:$0x3]
  %v172 = vld [vmem:[%s2 + $0x50] sm:$0xff]
  %v173 = vld [vmem:[%s2 + $0x58] sm:$0x3]
  %v174 = vld [vmem:[%s2 + $0x60] sm:$0xff]
  %v175 = vld [vmem:[%s2 + $0x68] sm:$0x3]
  %v176 = vld [vmem:[%s2 + $0x70] sm:$0xff]
  %v177 = vld [vmem:[%s2 + $0x78] sm:$0x3]
  %vm178 = vcmask 244736
  %v180 = vsel %vm178, %v162, 0
  %v183 = vsel %vm178, %v163, 0
  %vm185 = vcmask 1045504
  %v187 = vsel %vm185, %v133, 0
  %189 = vmatpush.msra.mxu0 0.0
  %190 = vmatpush.msra.mxu0 0.0
  %191 = vmatpush.msra.mxu0 0.0
  %192 = vmatpush.msra.mxu0 0.0
  %193 = vmatpush.msra.mxu0 0.0
  %194 = vmatpush.msra.mxu0 0.0
  %195 = vmatpush.msra.mxu0 0.0
  %196 = vmatpush.msra.mxu0 0.0
  %197 = vmatpush.msra.mxu0 0.0
  %198 = vmatpush.msra.mxu0 0.0
  %199 = vmatpush.msra.mxu0 0.0
  %200 = vmatpush.msra.mxu0 0.0
  %201 = vmatpush.msra.mxu0 %v187
  %202 = vmatpush.msra.mxu0 %v132
  %203 = vmatpush.msra.mxu0 %v131
  %204 = vmatpush.msra.mxu0 %v130
  %205 = vmatmul.f32.gmra.mxu0 %v180
  %v206 = vpop.f32.mrf.mxu0
  %v207 = vadd.f32 0.0, %v206
  %208 = vmatmul.f32.gmra.mxu0 %v183
  %v209 = vpop.f32.mrf.mxu0
  %v210 = vadd.f32 0.0, %v209
  %211 = vdwg.mxu0
  %v213 = vsel %vm178, %v164, 0
  %v216 = vsel %vm178, %v165, 0
  %v219 = vsel %vm185, %v137, 0
  %221 = vmatpush.msra.mxu0 0.0
  %222 = vmatpush.msra.mxu0 0.0
  %223 = vmatpush.msra.mxu0 0.0
  %224 = vmatpush.msra.mxu0 0.0
  %225 = vmatpush.msra.mxu0 0.0
  %226 = vmatpush.msra.mxu0 0.0
  %227 = vmatpush.msra.mxu0 0.0
  %228 = vmatpush.msra.mxu0 0.0
  %229 = vmatpush.msra.mxu0 0.0
  %230 = vmatpush.msra.mxu0 0.0
  %231 = vmatpush.msra.mxu0 0.0
  %232 = vmatpush.msra.mxu0 0.0
  %233 = vmatpush.msra.mxu0 %v219
  %234 = vmatpush.msra.mxu0 %v136
  %235 = vmatpush.msra.mxu0 %v135
  %236 = vmatpush.msra.mxu0 %v134
  %237 = vmatmul.f32.gmra.mxu0 %v213
  %v238 = vpop.f32.mrf.mxu0
  %v239 = vadd.f32 0.0, %v238
  %240 = vmatmul.f32.gmra.mxu0 %v216
  %v241 = vpop.f32.mrf.mxu0
  %v242 = vadd.f32 0.0, %v241
  %243 = vdwg.mxu0
  %v245 = vsel %vm178, %v166, 0
  %v248 = vsel %vm178, %v167, 0
  %v251 = vsel %vm185, %v141, 0
  %253 = vmatpush.msra.mxu0 0.0
  %254 = vmatpush.msra.mxu0 0.0
  %255 = vmatpush.msra.mxu0 0.0
  %256 = vmatpush.msra.mxu0 0.0
  %257 = vmatpush.msra.mxu0 0.0
  %258 = vmatpush.msra.mxu0 0.0
  %259 = vmatpush.msra.mxu0 0.0
  %260 = vmatpush.msra.mxu0 0.0
  %261 = vmatpush.msra.mxu0 0.0
  %262 = vmatpush.msra.mxu0 0.0
  %263 = vmatpush.msra.mxu0 0.0
  %264 = vmatpush.msra.mxu0 0.0
  %265 = vmatpush.msra.mxu0 %v251
  %266 = vmatpush.msra.mxu0 %v140
  %267 = vmatpush.msra.mxu0 %v139
  %268 = vmatpush.msra.mxu0 %v138
  %269 = vmatmul.f32.gmra.mxu0 %v245
  %v270 = vpop.f32.mrf.mxu0
  %v271 = vadd.f32 0.0, %v270
  %272 = vmatmul.f32.gmra.mxu0 %v248
  %v273 = vpop.f32.mrf.mxu0
  %v274 = vadd.f32 0.0, %v273
  %275 = vdwg.mxu0
  %v277 = vsel %vm178, %v168, 0
  %v280 = vsel %vm178, %v169, 0
  %v283 = vsel %vm185, %v145, 0
  %285 = vmatpush.msra.mxu0 0.0
  %286 = vmatpush.msra.mxu0 0.0
  %287 = vmatpush.msra.mxu0 0.0
  %288 = vmatpush.msra.mxu0 0.0
  %289 = vmatpush.msra.mxu0 0.0
  %290 = vmatpush.msra.mxu0 0.0
  %291 = vmatpush.msra.mxu0 0.0
  %292 = vmatpush.msra.mxu0 0.0
  %293 = vmatpush.msra.mxu0 0.0
  %294 = vmatpush.msra.mxu0 0.0
  %295 = vmatpush.msra.mxu0 0.0
  %296 = vmatpush.msra.mxu0 0.0
  %297 = vmatpush.msra.mxu0 %v283
  %298 = vmatpush.msra.mxu0 %v144
  %299 = vmatpush.msra.mxu0 %v143
  %300 = vmatpush.msra.mxu0 %v142
  %301 = vmatmul.f32.gmra.mxu0 %v277
  %v302 = vpop.f32.mrf.mxu0
  %v303 = vadd.f32 0.0, %v302
  %304 = vmatmul.f32.gmra.mxu0 %v280
  %v305 = vpop.f32.mrf.mxu0
  %v306 = vadd.f32 0.0, %v305
  %307 = vdwg.mxu0
  %v309 = vsel %vm178, %v170, 0
  %v312 = vsel %vm178, %v171, 0
  %v315 = vsel %vm185, %v149, 0
  %317 = vmatpush.msra.mxu0 0.0
  %318 = vmatpush.msra.mxu0 0.0
  %319 = vmatpush.msra.mxu0 0.0
  %320 = vmatpush.msra.mxu0 0.0
  %321 = vmatpush.msra.mxu0 0.0
  %322 = vmatpush.msra.mxu0 0.0
  %323 = vmatpush.msra.mxu0 0.0
  %324 = vmatpush.msra.mxu0 0.0
  %325 = vmatpush.msra.mxu0 0.0
  %326 = vmatpush.msra.mxu0 0.0
  %327 = vmatpush.msra.mxu0 0.0
  %328 = vmatpush.msra.mxu0 0.0
  %329 = vmatpush.msra.mxu0 %v315
  %330 = vmatpush.msra.mxu0 %v148
  %331 = vmatpush.msra.mxu0 %v147
  %332 = vmatpush.msra.mxu0 %v146
  %333 = vmatmul.f32.gmra.mxu0 %v309
  %v334 = vpop.f32.mrf.mxu0
  %v335 = vadd.f32 0.0, %v334
  %336 = vmatmul.f32.gmra.mxu0 %v312
  %v337 = vpop.f32.mrf.mxu0
  %v338 = vadd.f32 0.0, %v337
  %339 = vdwg.mxu0
  %v341 = vsel %vm178, %v172, 0
  %v344 = vsel %vm178, %v173, 0
  %v347 = vsel %vm185, %v153, 0
  %349 = vmatpush.msra.mxu0 0.0
  %350 = vmatpush.msra.mxu0 0.0
  %351 = vmatpush.msra.mxu0 0.0
  %352 = vmatpush.msra.mxu0 0.0
  %353 = vmatpush.msra.mxu0 0.0
  %354 = vmatpush.msra.mxu0 0.0
  %355 = vmatpush.msra.mxu0 0.0
  %356 = vmatpush.msra.mxu0 0.0
  %357 = vmatpush.msra.mxu0 0.0
  %358 = vmatpush.msra.mxu0 0.0
  %359 = vmatpush.msra.mxu0 0.0
  %360 = vmatpush.msra.mxu0 0.0
  %361 = vmatpush.msra.mxu0 %v347
  %362 = vmatpush.msra.mxu0 %v152
  %363 = vmatpush.msra.mxu0 %v151
  %364 = vmatpush.msra.mxu0 %v150
  %365 = vmatmul.f32.gmra.mxu0 %v341
  %v366 = vpop.f32.mrf.mxu0
  %v367 = vadd.f32 0.0, %v366
  %368 = vmatmul.f32.gmra.mxu0 %v344
  %v369 = vpop.f32.mrf.mxu0
  %v370 = vadd.f32 0.0, %v369
  %371 = vdwg.mxu0
  %v373 = vsel %vm178, %v174, 0
  %v376 = vsel %vm178, %v175, 0
  %v379 = vsel %vm185, %v157, 0
  %381 = vmatpush.msra.mxu0 0.0
  %382 = vmatpush.msra.mxu0 0.0
  %383 = vmatpush.msra.mxu0 0.0
  %384 = vmatpush.msra.mxu0 0.0
  %385 = vmatpush.msra.mxu0 0.0
  %386 = vmatpush.msra.mxu0 0.0
  %387 = vmatpush.msra.mxu0 0.0
  %388 = vmatpush.msra.mxu0 0.0
  %389 = vmatpush.msra.mxu0 0.0
  %390 = vmatpush.msra.mxu0 0.0
  %391 = vmatpush.msra.mxu0 0.0
  %392 = vmatpush.msra.mxu0 0.0
  %393 = vmatpush.msra.mxu0 %v379
  %394 = vmatpush.msra.mxu0 %v156
  %395 = vmatpush.msra.mxu0 %v155
  %396 = vmatpush.msra.mxu0 %v154
  %397 = vmatmul.f32.gmra.mxu0 %v373
  %v398 = vpop.f32.mrf.mxu0
  %v399 = vadd.f32 0.0, %v398
  %400 = vmatmul.f32.gmra.mxu0 %v376
  %v401 = vpop.f32.mrf.mxu0
  %v402 = vadd.f32 0.0, %v401
  %403 = vdwg.mxu0
  %v405 = vsel %vm178, %v176, 0
  %v408 = vsel %vm178, %v177, 0
  %v411 = vsel %vm185, %v161, 0
  %413 = vmatpush.msra.mxu0 0.0
  %414 = vmatpush.msra.mxu0 0.0
  %415 = vmatpush.msra.mxu0 0.0
  %416 = vmatpush.msra.mxu0 0.0
  %417 = vmatpush.msra.mxu0 0.0
  %418 = vmatpush.msra.mxu0 0.0
  %419 = vmatpush.msra.mxu0 0.0
  %420 = vmatpush.msra.mxu0 0.0
  %421 = vmatpush.msra.mxu0 0.0
  %422 = vmatpush.msra.mxu0 0.0
  %423 = vmatpush.msra.mxu0 0.0
  %424 = vmatpush.msra.mxu0 0.0
  %425 = vmatpush.msra.mxu0 %v411
  %426 = vmatpush.msra.mxu0 %v160
  %427 = vmatpush.msra.mxu0 %v159
  %428 = vmatpush.msra.mxu0 %v158
  %429 = vmatmul.f32.gmra.mxu0 %v405
  %v430 = vpop.f32.mrf.mxu0
  %v431 = vadd.f32 0.0, %v430
  %432 = vmatmul.f32.gmra.mxu0 %v408
  %v433 = vpop.f32.mrf.mxu0
  %v434 = vadd.f32 0.0, %v433
  %435 = vdwg.mxu0
  %vm436 = vcmask 15360
  %437 = vst.msk [vmem:[%s3] sm:$0xff] %vm436, %v207
  %vm438 = vcmask 9216
  %439 = vst.msk [vmem:[%s3 + $0x8] sm:$0x3] %vm438, %v210
  %440 = vst.msk [vmem:[%s3 + $0x10] sm:$0xff] %vm436, %v239
  %441 = vst.msk [vmem:[%s3 + $0x18] sm:$0x3] %vm438, %v242
  %442 = vst.msk [vmem:[%s3 + $0x20] sm:$0xff] %vm436, %v271
  %443 = vst.msk [vmem:[%s3 + $0x28] sm:$0x3] %vm438, %v274
  %444 = vst.msk [vmem:[%s3 + $0x30] sm:$0xff] %vm436, %v303
  %445 = vst.msk [vmem:[%s3 + $0x38] sm:$0x3] %vm438, %v306
  %446 = vst.msk [vmem:[%s3 + $0x40] sm:$0xff] %vm436, %v335
  %447 = vst.msk [vmem:[%s3 + $0x48] sm:$0x3] %vm438, %v338
  %448 = vst.msk [vmem:[%s3 + $0x50] sm:$0xff] %vm436, %v367
  %449 = vst.msk [vmem:[%s3 + $0x58] sm:$0x3] %vm438, %v370
  %450 = vst.msk [vmem:[%s3 + $0x60] sm:$0xff] %vm436, %v399
  %451 = vst.msk [vmem:[%s3 + $0x68] sm:$0x3] %vm438, %v402
  %452 = vst.msk [vmem:[%s3 + $0x70] sm:$0xff] %vm436, %v431
  %453 = vst.msk [vmem:[%s3 + $0x78] sm:$0x3] %vm438, %v434
  // Predicated region
  $region14: #{tpu_custom_call.1} parent=0 // pred_check
    _
  $region15: #{tpu_custom_call.1} parent=0 // pred_check_branch
    %455 = sbr.rel (0) target = $region17
  $region16: #{tpu_custom_call.1} parent=0 // pred_region
    _
  $region17: #{tpu_custom_call.1} parent=0 // pred_fallthru
    _
  // Predicated region
  $region18: #{tpu_custom_call.1} parent=0 // pred_check
    _
  $region19: #{tpu_custom_call.1} parent=0 // pred_check_branch
    %457 = sbr.rel (0) target = $region21
  $region20: #{tpu_custom_call.1} parent=0 // pred_region
    _
  $region21: #{tpu_custom_call.1} parent=0 // pred_fallthru
    _

</llo_original>
